<compile_context>
chip_gen: v6e
topology: v6e:2x2x1
jax: 0.10.0
libtpu: 0.0.40
codegen_flags: <defaults>
</compile_context>

<pallas_src>
import jax
import jax.numpy as jnp
from jax.experimental import pallas as pl
from jax.experimental.pallas import tpu as pltpu  # noqa: F401  (TPU backend)


def cat_tanh_kernel(x_ref, y_ref):
    # x_ref: (B, CL) lane-dense;  y_ref: (B, 2*CL) lane-dense.
    t = jnp.tanh(x_ref[...])                       # tanh rides the EUP slot
    # Build the duplicated row in registers and do a single full-tile store.
    y_ref[...] = jnp.concatenate([t, t], axis=-1)


def model_forward(x):
    B, C, L = x.shape
    CL = C * L
    # Wrapper-side layout plumbing only (no extra compute): lane-dense 2-D slab.
    x2 = x.reshape(B, CL)
    y = pl.pallas_call(
        cat_tanh_kernel,
        out_shape=jax.ShapeDtypeStruct((B, 2 * CL), x.dtype),
        # Full-array blocks (legal because block == array dims); single program,
        # no grid needed at this size.
        in_specs=[pl.BlockSpec((B, CL), lambda: (0, 0))],
        out_specs=pl.BlockSpec((B, 2 * CL), lambda: (0, 0)),
    )(x2)
    # Row-major (B, 2*CL) already has cat((x, x), dim=1) ordering per batch,
    # so the module's view(-1, 2) is a pure (free) reshape -- no transpose.
    return y.reshape(-1, 2)


if __name__ == "__main__":
    key = jax.random.PRNGKey(0)
    x = jax.random.normal(key, (2, 3, 4), dtype=jnp.float32)

    out = model_forward(x)
    jax.block_until_ready(out)

    # Reference check in plain JAX (mirrors the torch module's return value).
    ref = jnp.tanh(jnp.concatenate([x, x], axis=1)).reshape(-1, 2)
    assert out.shape == (24, 2), out.shape
    assert jnp.allclose(out, ref, atol=1e-6), "mismatch vs reference"

    print("KERNEL_OK")
</pallas_src>

<mosaic_0001>
module attributes {stable_mosaic.version = 11 : i64} {
  func.func @cat_tanh_kernel(%arg0: memref<2x12xf32, #tpu.memory_space<vmem>>, %arg1: memref<2x24xf32, #tpu.memory_space<vmem>>) attributes {dimension_semantics = [], scalar_prefetch = 0 : i64, scratch_operands = 0 : i64, tpu.core_type = #tpu.core_type<tc>} {
    %c0 = arith.constant 0 : index
    %c0_0 = arith.constant 0 : index
    %0 = vector.load %arg0[%c0, %c0_0] : memref<2x12xf32, #tpu.memory_space<vmem>>, vector<2x12xf32>
    %1 = math.tanh %0 : vector<2x12xf32>
    %2 = tpu.concatenate %1, %1 in 1 : vector<2x12xf32>, vector<2x12xf32> -> vector<2x24xf32>
    %c0_1 = arith.constant 0 : index
    %c0_2 = arith.constant 0 : index
    %3 = vector.load %arg1[%c0_1, %c0_2] : memref<2x24xf32, #tpu.memory_space<vmem>>, vector<2x24xf32>
    tpu.vector_store %arg1[%c0_1, %c0_2], %2 {strides = array<i32>} : memref<2x24xf32, #tpu.memory_space<vmem>>, vector<2x24xf32>,
    return
  }
}

</mosaic_0001>

<llo_original>
// kernel: tpu_custom_call.1
$region0: #{tpu_custom_call.1}
  #allocation0 [shape = 'u32[]', space=smem, size = 0x4, offset = 0x4, fixed_abs, tag = 'smem constant byte address 0x4 - core index']
  #allocation1 [shape = 'u32[144,128]{1,0:T(1,128)}', space=vmem, size = 0x12000, scoped, tag = 'internal scratch']
  %s0 = inlined_call_operand.hbm [shape: f32[2,12], index: 0, kind: input, shape index: {}]
  %s1 = inlined_call_operand.hbm [shape: f32[2,24], index: 1, kind: output, shape index: {}]
  %s2 = sld [smem:[#allocation0]]
  $region18: #{tpu_custom_call.1} parent=0
    _
  %s4 = ssub.s32 1, %s2
  %s5 = scalar_select 0, %s4, %s2
  $region1: #{tpu_custom_call.1} parent=0
    #allocation2 [shape = 'u8[1024]{0}', space=vmem, size = 0x400, scoped, tag = 'input window, operand 0, single buffered']
    #allocation3 [shape = 's32[1]{0}', space=sflag, size = 0x4, scoped, tag = 'scoped memory for tpu_custom_call.1']
    #allocation4 [shape = 's32[1]{0}', space=sflag, size = 0x4, scoped, tag = 'scoped memory for tpu_custom_call.1']
    #allocation5 [shape = 'u8[1024]{0}', space=vmem, size = 0x400, scoped, tag = 'output window, operand 0, single buffered']
    %6 = vsyncpa [#allocation3], 0
    %7 = vsyncpa [#allocation4], 0
    // Predicated region
    $region2: #{tpu_custom_call.1} parent=1 // pred_check
      _
    $region3: #{tpu_custom_call.1} parent=1 // pred_check_branch
      %9 = sbr.rel (0) target = $region5
    $region4: #{tpu_custom_call.1} parent=1 // pred_region
      %s11 = ssub.s32 32, 32
      %12 = vsyncadd [#allocation3], %s11
      %s14 = sshll.u32 [#allocation2], 4
      %s15 = int_to_ptr.vmem [resolvable:$true] %s14
      %17 = dma.hbm_to_vmem [thread:$0]  %s0, 32, %s15, [#allocation3]
    $region5: #{tpu_custom_call.1} parent=1 // pred_fallthru
      _
    // Predicated region
    $region6: #{tpu_custom_call.1} parent=1 // pred_check
      _
    $region7: #{tpu_custom_call.1} parent=1 // pred_check_branch
      %19 = sbr.rel (0) target = $region9
    $region8: #{tpu_custom_call.1} parent=1 // pred_region
      %20 = dma.done [#allocation3], 32
    $region9: #{tpu_custom_call.1} parent=1 // pred_fallthru
      _
    %v21 = vld [vmem:[#allocation2] sm:$0x3]
    %v22 = vtanh.pop %v21
    %24 = vrot.lane.b32.xlu0 %v22, 12
    %v25 = vpop.permute.xlu0 %24
    %vm27 = vcmask 97280
    %v28 = vsel %vm27, %v22, %v25
    %vm29 = vcmask 189440
    %30 = vst.msk [vmem:[#allocation5] sm:$0x3] %vm29, %v28
    // Predicated region
    $region10: #{tpu_custom_call.1} parent=1 // pred_check
      _
    $region11: #{tpu_custom_call.1} parent=1 // pred_check_branch
      %32 = sbr.rel (0) target = $region13
    $region12: #{tpu_custom_call.1} parent=1 // pred_region
      %s34 = ssub.s32 32, 32
      %35 = vsyncadd [#allocation4], %s34
      %s37 = sshll.u32 [#allocation5], 4
      %s38 = int_to_ptr.vmem [resolvable:$true] %s37
      %40 = dma.vmem_to_hbm [thread:$0]  %s38, 32, %s1, [#allocation4]
    $region13: #{tpu_custom_call.1} parent=1 // pred_fallthru
      _
    // Predicated region
    $region14: #{tpu_custom_call.1} parent=1 // pred_check
      _
    $region15: #{tpu_custom_call.1} parent=1 // pred_check_branch
      %42 = sbr.rel (0) target = $region17
    $region16: #{tpu_custom_call.1} parent=1 // pred_region
      %43 = dma.done [#allocation4], 32
    $region17: #{tpu_custom_call.1} parent=1 // pred_fallthru
      _
    %44 = vsyncpa [#allocation3], 1
    %45 = vsyncpa [#allocation4], 1

</llo_original>
